<compile_context>
chip_gen: v5e
topology: v5e:2x2
jax: 0.10.0
libtpu: 0.0.40
codegen_flags: <defaults>
</compile_context>

<pallas_src>
import functools

import jax
import jax.numpy as jnp
from jax.experimental import pallas as pl
from jax.experimental.pallas import tpu as pltpu

HIDDEN = 10


def dnn_kernel(x_ref, w1_ref, b1_ref, w2_ref, b2_ref, o_ref):
    # x tile: (2, S, 128) float32 — batch dense on sublanes x lanes.
    x0 = x_ref[0]            # (S, 128)
    x1 = x_ref[1]            # (S, 128)
    acc = jnp.zeros_like(x0) + b2_ref[0]
    # Static unroll over the 10 hidden units: pure VPU FMAs on full vregs.
    for j in range(HIDDEN):
        w1_0j = w1_ref[0, j]     # read the four SMEM scalars once per j
        w1_1j = w1_ref[1, j]
        b1j = b1_ref[j]
        w2j = w2_ref[j]
        h = x0 * w1_0j + x1 * w1_1j + b1j      # fc1 row j
        h = jnp.maximum(h, 0.0)                # ReLU
        acc = acc + h * w2j                    # fc2 accumulation
    o_ref[...] = acc            # one dense (S, 128) store per tile


@functools.partial(jax.jit, static_argnames=("block_rows",))
def dnn_forward(x, w1, b1, w2, b2, *, block_rows=2048):
    """x: (B, 2) f32; w1: (2, 10); b1: (10,); w2: (10,); b2: (1,) -> (B, 1)."""
    B = x.shape[0]

    # Sublane rows of 128 lanes each, rounded up to a multiple of 8.
    rows_needed = ((pl.cdiv(B, 128) + 7) // 8) * 8
    S = min(block_rows, rows_needed)
    n_tiles = pl.cdiv(rows_needed, S)
    # Prefer >= 2 tiles for megacore / v7x TC sharding once there is enough work.
    if n_tiles == 1 and rows_needed >= 16:
        S = ((rows_needed // 2 + 7) // 8) * 8
        n_tiles = pl.cdiv(rows_needed, S)
    rows = n_tiles * S
    Bp = rows * 128

    # Dense relayout: batch fills sublanes x lanes; zero-pad to the tile multiple.
    # TODO(synk): for very large batches this relayout is an extra HBM pass; it can
    # be removed by producing x in (2, rows, 128) layout upstream or fusing it in.
    xt = jnp.zeros((2, Bp), jnp.float32).at[:, :B].set(x.T.astype(jnp.float32))
    xt = xt.reshape(2, rows, 128)

    smem = pl.BlockSpec(memory_space=pltpu.MemorySpace.SMEM)
    out_slab = pl.pallas_call(
        dnn_kernel,
        out_shape=jax.ShapeDtypeStruct((rows, 128), jnp.float32),
        grid=(n_tiles,),
        in_specs=[
            pl.BlockSpec((2, S, 128), lambda i: (0, i, 0)),  # x tile, auto double-buffered
            smem,                                            # w1 (2, 10)  resident scalars
            smem,                                            # b1 (10,)
            smem,                                            # w2 (10,)
            smem,                                            # b2 (1,)
        ],
        out_specs=pl.BlockSpec((S, 128), lambda i: (i, 0)),
        compiler_params=pltpu.CompilerParams(
            dimension_semantics=("parallel",),               # batch tiles are independent
        ),
        cost_estimate=pl.CostEstimate(
            flops=70 * Bp, transcendentals=0, bytes_accessed=12 * Bp + 176),
    )(xt, w1, b1, w2, b2)

    # Drop padded lanes and restore the (B, 1) torch-style output.
    return out_slab.reshape(-1)[:B].reshape(B, 1)


if __name__ == "__main__":
    key = jax.random.PRNGKey(0)
    kx, k1, k2, k3, k4 = jax.random.split(key, 5)
    batch = 8
    x = jax.random.normal(kx, (batch, 2), jnp.float32)

    # torch stores Linear weight as (out, in); we keep the transposed (in, out) layout.
    bound1 = float(1.0 / jnp.sqrt(2.0))
    bound2 = float(1.0 / jnp.sqrt(10.0))
    w1 = jax.random.uniform(k1, (2, HIDDEN), jnp.float32, -bound1, bound1)
    b1 = jax.random.uniform(k2, (HIDDEN,), jnp.float32, -bound1, bound1)
    w2 = jax.random.uniform(k3, (HIDDEN,), jnp.float32, -bound2, bound2)
    b2 = jax.random.uniform(k4, (1,), jnp.float32, -bound2, bound2)

    out = jax.block_until_ready(dnn_forward(x, w1, b1, w2, b2))

    # Reference check in plain JAX (same semantics as the torch module).
    ref = jnp.maximum(x @ w1 + b1, 0.0) @ w2.reshape(HIDDEN, 1) + b2
    assert out.shape == (batch, 1)
    assert jnp.allclose(out, ref, atol=1e-5, rtol=1e-5)

    print("KERNEL_OK")
</pallas_src>

<mosaic_0001>
module attributes {stable_mosaic.version = 11 : i64} {
  func.func @dnn_kernel(%arg0: i32, %arg1: memref<2x8x128xf32, #tpu.memory_space<vmem>>, %arg2: memref<2x10xf32, #tpu.memory_space<smem>>, %arg3: memref<10xf32, #tpu.memory_space<smem>>, %arg4: memref<10xf32, #tpu.memory_space<smem>>, %arg5: memref<1xf32, #tpu.memory_space<smem>>, %arg6: memref<8x128xf32, #tpu.memory_space<vmem>>) attributes {dimension_semantics = [#tpu.dimension_semantics<parallel>], iteration_bounds = array<i64: 1>, scalar_prefetch = 0 : i64, scratch_operands = 0 : i64, tpu.core_type = #tpu.core_type<tc>, window_params = [{transform_indices = @transform_0, window_bounds = array<i64: 2, 8, 128>}, {transform_indices = @transform_1, window_bounds = array<i64: 2, 10>}, {transform_indices = @transform_2, window_bounds = array<i64: 10>}, {transform_indices = @transform_3, window_bounds = array<i64: 10>}, {transform_indices = @transform_4, window_bounds = array<i64: 1>}, {transform_indices = @transform_5, window_bounds = array<i64: 8, 128>}]} {
    %c0 = arith.constant 0 : index
    %c0_0 = arith.constant 0 : index
    %c0_1 = arith.constant 0 : index
    %0 = vector.load %arg1[%c0, %c0_0, %c0_1] : memref<2x8x128xf32, #tpu.memory_space<vmem>>, vector<1x8x128xf32>
    %1 = vector.shape_cast %0 : vector<1x8x128xf32> to vector<8x128xf32>
    %c1 = arith.constant 1 : index
    %c0_2 = arith.constant 0 : index
    %c0_3 = arith.constant 0 : index
    %2 = vector.load %arg1[%c1, %c0_2, %c0_3] : memref<2x8x128xf32, #tpu.memory_space<vmem>>, vector<1x8x128xf32>
    %3 = vector.shape_cast %2 : vector<1x8x128xf32> to vector<8x128xf32>
    %cst = arith.constant 0.000000e+00 : f32
    %4 = vector.broadcast %cst : f32 to vector<8x128xf32>
    %c0_4 = arith.constant 0 : index
    %5 = memref.load %arg5[%c0_4] : memref<1xf32, #tpu.memory_space<smem>>
    %6 = vector.broadcast %5 : f32 to vector<8x128xf32>
    %7 = arith.addf %4, %6 : vector<8x128xf32>
    %c0_5 = arith.constant 0 : index
    %c0_6 = arith.constant 0 : index
    %8 = memref.load %arg2[%c0_5, %c0_6] : memref<2x10xf32, #tpu.memory_space<smem>>
    %c1_7 = arith.constant 1 : index
    %c0_8 = arith.constant 0 : index
    %9 = memref.load %arg2[%c1_7, %c0_8] : memref<2x10xf32, #tpu.memory_space<smem>>
    %c0_9 = arith.constant 0 : index
    %10 = memref.load %arg3[%c0_9] : memref<10xf32, #tpu.memory_space<smem>>
    %c0_10 = arith.constant 0 : index
    %11 = memref.load %arg4[%c0_10] : memref<10xf32, #tpu.memory_space<smem>>
    %12 = vector.broadcast %8 : f32 to vector<8x128xf32>
    %13 = arith.mulf %1, %12 : vector<8x128xf32>
    %14 = vector.broadcast %9 : f32 to vector<8x128xf32>
    %15 = arith.mulf %3, %14 : vector<8x128xf32>
    %16 = arith.addf %13, %15 : vector<8x128xf32>
    %17 = vector.broadcast %10 : f32 to vector<8x128xf32>
    %18 = arith.addf %16, %17 : vector<8x128xf32>
    %cst_11 = arith.constant 0.000000e+00 : f32
    %19 = vector.broadcast %cst_11 : f32 to vector<8x128xf32>
    %20 = arith.maximumf %18, %19 : vector<8x128xf32>
    %21 = vector.broadcast %11 : f32 to vector<8x128xf32>
    %22 = arith.mulf %20, %21 : vector<8x128xf32>
    %23 = arith.addf %7, %22 : vector<8x128xf32>
    %c0_12 = arith.constant 0 : index
    %c1_13 = arith.constant 1 : index
    %24 = memref.load %arg2[%c0_12, %c1_13] : memref<2x10xf32, #tpu.memory_space<smem>>
    %c1_14 = arith.constant 1 : index
    %c1_15 = arith.constant 1 : index
    %25 = memref.load %arg2[%c1_14, %c1_15] : memref<2x10xf32, #tpu.memory_space<smem>>
    %c1_16 = arith.constant 1 : index
    %26 = memref.load %arg3[%c1_16] : memref<10xf32, #tpu.memory_space<smem>>
    %c1_17 = arith.constant 1 : index
    %27 = memref.load %arg4[%c1_17] : memref<10xf32, #tpu.memory_space<smem>>
    %28 = vector.broadcast %24 : f32 to vector<8x128xf32>
    %29 = arith.mulf %1, %28 : vector<8x128xf32>
    %30 = vector.broadcast %25 : f32 to vector<8x128xf32>
    %31 = arith.mulf %3, %30 : vector<8x128xf32>
    %32 = arith.addf %29, %31 : vector<8x128xf32>
    %33 = vector.broadcast %26 : f32 to vector<8x128xf32>
    %34 = arith.addf %32, %33 : vector<8x128xf32>
    %cst_18 = arith.constant 0.000000e+00 : f32
    %35 = vector.broadcast %cst_18 : f32 to vector<8x128xf32>
    %36 = arith.maximumf %34, %35 : vector<8x128xf32>
    %37 = vector.broadcast %27 : f32 to vector<8x128xf32>
    %38 = arith.mulf %36, %37 : vector<8x128xf32>
    %39 = arith.addf %23, %38 : vector<8x128xf32>
    %c0_19 = arith.constant 0 : index
    %c2 = arith.constant 2 : index
    %40 = memref.load %arg2[%c0_19, %c2] : memref<2x10xf32, #tpu.memory_space<smem>>
    %c1_20 = arith.constant 1 : index
    %c2_21 = arith.constant 2 : index
    %41 = memref.load %arg2[%c1_20, %c2_21] : memref<2x10xf32, #tpu.memory_space<smem>>
    %c2_22 = arith.constant 2 : index
    %42 = memref.load %arg3[%c2_22] : memref<10xf32, #tpu.memory_space<smem>>
    %c2_23 = arith.constant 2 : index
    %43 = memref.load %arg4[%c2_23] : memref<10xf32, #tpu.memory_space<smem>>
    %44 = vector.broadcast %40 : f32 to vector<8x128xf32>
    %45 = arith.mulf %1, %44 : vector<8x128xf32>
    %46 = vector.broadcast %41 : f32 to vector<8x128xf32>
    %47 = arith.mulf %3, %46 : vector<8x128xf32>
    %48 = arith.addf %45, %47 : vector<8x128xf32>
    %49 = vector.broadcast %42 : f32 to vector<8x128xf32>
    %50 = arith.addf %48, %49 : vector<8x128xf32>
    %cst_24 = arith.constant 0.000000e+00 : f32
    %51 = vector.broadcast %cst_24 : f32 to vector<8x128xf32>
    %52 = arith.maximumf %50, %51 : vector<8x128xf32>
    %53 = vector.broadcast %43 : f32 to vector<8x128xf32>
    %54 = arith.mulf %52, %53 : vector<8x128xf32>
    %55 = arith.addf %39, %54 : vector<8x128xf32>
    %c0_25 = arith.constant 0 : index
    %c3 = arith.constant 3 : index
    %56 = memref.load %arg2[%c0_25, %c3] : memref<2x10xf32, #tpu.memory_space<smem>>
    %c1_26 = arith.constant 1 : index
    %c3_27 = arith.constant 3 : index
    %57 = memref.load %arg2[%c1_26, %c3_27] : memref<2x10xf32, #tpu.memory_space<smem>>
    %c3_28 = arith.constant 3 : index
    %58 = memref.load %arg3[%c3_28] : memref<10xf32, #tpu.memory_space<smem>>
    %c3_29 = arith.constant 3 : index
    %59 = memref.load %arg4[%c3_29] : memref<10xf32, #tpu.memory_space<smem>>
    %60 = vector.broadcast %56 : f32 to vector<8x128xf32>
    %61 = arith.mulf %1, %60 : vector<8x128xf32>
    %62 = vector.broadcast %57 : f32 to vector<8x128xf32>
    %63 = arith.mulf %3, %62 : vector<8x128xf32>
    %64 = arith.addf %61, %63 : vector<8x128xf32>
    %65 = vector.broadcast %58 : f32 to vector<8x128xf32>
    %66 = arith.addf %64, %65 : vector<8x128xf32>
    %cst_30 = arith.constant 0.000000e+00 : f32
    %67 = vector.broadcast %cst_30 : f32 to vector<8x128xf32>
    %68 = arith.maximumf %66, %67 : vector<8x128xf32>
    %69 = vector.broadcast %59 : f32 to vector<8x128xf32>
    %70 = arith.mulf %68, %69 : vector<8x128xf32>
    %71 = arith.addf %55, %70 : vector<8x128xf32>
    %c0_31 = arith.constant 0 : index
    %c4 = arith.constant 4 : index
    %72 = memref.load %arg2[%c0_31, %c4] : memref<2x10xf32, #tpu.memory_space<smem>>
    %c1_32 = arith.constant 1 : index
    %c4_33 = arith.constant 4 : index
    %73 = memref.load %arg2[%c1_32, %c4_33] : memref<2x10xf32, #tpu.memory_space<smem>>
    %c4_34 = arith.constant 4 : index
    %74 = memref.load %arg3[%c4_34] : memref<10xf32, #tpu.memory_space<smem>>
    %c4_35 = arith.constant 4 : index
    %75 = memref.load %arg4[%c4_35] : memref<10xf32, #tpu.memory_space<smem>>
    %76 = vector.broadcast %72 : f32 to vector<8x128xf32>
    %77 = arith.mulf %1, %76 : vector<8x128xf32>
    %78 = vector.broadcast %73 : f32 to vector<8x128xf32>
    %79 = arith.mulf %3, %78 : vector<8x128xf32>
    %80 = arith.addf %77, %79 : vector<8x128xf32>
    %81 = vector.broadcast %74 : f32 to vector<8x128xf32>
    %82 = arith.addf %80, %81 : vector<8x128xf32>
    %cst_36 = arith.constant 0.000000e+00 : f32
    %83 = vector.broadcast %cst_36 : f32 to vector<8x128xf32>
    %84 = arith.maximumf %82, %83 : vector<8x128xf32>
    %85 = vector.broadcast %75 : f32 to vector<8x128xf32>
    %86 = arith.mulf %84, %85 : vector<8x128xf32>
    %87 = arith.addf %71, %86 : vector<8x128xf32>
    %c0_37 = arith.constant 0 : index
    %c5 = arith.constant 5 : index
    %88 = memref.load %arg2[%c0_37, %c5] : memref<2x10xf32, #tpu.memory_space<smem>>
    %c1_38 = arith.constant 1 : index
    %c5_39 = arith.constant 5 : index
    %89 = memref.load %arg2[%c1_38, %c5_39] : memref<2x10xf32, #tpu.memory_space<smem>>
    %c5_40 = arith.constant 5 : index
    %90 = memref.load %arg3[%c5_40] : memref<10xf32, #tpu.memory_space<smem>>
    %c5_41 = arith.constant 5 : index
    %91 = memref.load %arg4[%c5_41] : memref<10xf32, #tpu.memory_space<smem>>
    %92 = vector.broadcast %88 : f32 to vector<8x128xf32>
    %93 = arith.mulf %1, %92 : vector<8x128xf32>
    %94 = vector.broadcast %89 : f32 to vector<8x128xf32>
    %95 = arith.mulf %3, %94 : vector<8x128xf32>
    %96 = arith.addf %93, %95 : vector<8x128xf32>
    %97 = vector.broadcast %90 : f32 to vector<8x128xf32>
    %98 = arith.addf %96, %97 : vector<8x128xf32>
    %cst_42 = arith.constant 0.000000e+00 : f32
    %99 = vector.broadcast %cst_42 : f32 to vector<8x128xf32>
    %100 = arith.maximumf %98, %99 : vector<8x128xf32>
    %101 = vector.broadcast %91 : f32 to vector<8x128xf32>
    %102 = arith.mulf %100, %101 : vector<8x128xf32>
    %103 = arith.addf %87, %102 : vector<8x128xf32>
    %c0_43 = arith.constant 0 : index
    %c6 = arith.constant 6 : index
    %104 = memref.load %arg2[%c0_43, %c6] : memref<2x10xf32, #tpu.memory_space<smem>>
    %c1_44 = arith.constant 1 : index
    %c6_45 = arith.constant 6 : index
    %105 = memref.load %arg2[%c1_44, %c6_45] : memref<2x10xf32, #tpu.memory_space<smem>>
    %c6_46 = arith.constant 6 : index
    %106 = memref.load %arg3[%c6_46] : memref<10xf32, #tpu.memory_space<smem>>
    %c6_47 = arith.constant 6 : index
    %107 = memref.load %arg4[%c6_47] : memref<10xf32, #tpu.memory_space<smem>>
    %108 = vector.broadcast %104 : f32 to vector<8x128xf32>
    %109 = arith.mulf %1, %108 : vector<8x128xf32>
    %110 = vector.broadcast %105 : f32 to vector<8x128xf32>
    %111 = arith.mulf %3, %110 : vector<8x128xf32>
    %112 = arith.addf %109, %111 : vector<8x128xf32>
    %113 = vector.broadcast %106 : f32 to vector<8x128xf32>
    %114 = arith.addf %112, %113 : vector<8x128xf32>
    %cst_48 = arith.constant 0.000000e+00 : f32
    %115 = vector.broadcast %cst_48 : f32 to vector<8x128xf32>
    %116 = arith.maximumf %114, %115 : vector<8x128xf32>
    %117 = vector.broadcast %107 : f32 to vector<8x128xf32>
    %118 = arith.mulf %116, %117 : vector<8x128xf32>
    %119 = arith.addf %103, %118 : vector<8x128xf32>
    %c0_49 = arith.constant 0 : index
    %c7 = arith.constant 7 : index
    %120 = memref.load %arg2[%c0_49, %c7] : memref<2x10xf32, #tpu.memory_space<smem>>
    %c1_50 = arith.constant 1 : index
    %c7_51 = arith.constant 7 : index
    %121 = memref.load %arg2[%c1_50, %c7_51] : memref<2x10xf32, #tpu.memory_space<smem>>
    %c7_52 = arith.constant 7 : index
    %122 = memref.load %arg3[%c7_52] : memref<10xf32, #tpu.memory_space<smem>>
    %c7_53 = arith.constant 7 : index
    %123 = memref.load %arg4[%c7_53] : memref<10xf32, #tpu.memory_space<smem>>
    %124 = vector.broadcast %120 : f32 to vector<8x128xf32>
    %125 = arith.mulf %1, %124 : vector<8x128xf32>
    %126 = vector.broadcast %121 : f32 to vector<8x128xf32>
    %127 = arith.mulf %3, %126 : vector<8x128xf32>
    %128 = arith.addf %125, %127 : vector<8x128xf32>
    %129 = vector.broadcast %122 : f32 to vector<8x128xf32>
    %130 = arith.addf %128, %129 : vector<8x128xf32>
    %cst_54 = arith.constant 0.000000e+00 : f32
    %131 = vector.broadcast %cst_54 : f32 to vector<8x128xf32>
    %132 = arith.maximumf %130, %131 : vector<8x128xf32>
    %133 = vector.broadcast %123 : f32 to vector<8x128xf32>
    %134 = arith.mulf %132, %133 : vector<8x128xf32>
    %135 = arith.addf %119, %134 : vector<8x128xf32>
    %c0_55 = arith.constant 0 : index
    %c8 = arith.constant 8 : index
    %136 = memref.load %arg2[%c0_55, %c8] : memref<2x10xf32, #tpu.memory_space<smem>>
    %c1_56 = arith.constant 1 : index
    %c8_57 = arith.constant 8 : index
    %137 = memref.load %arg2[%c1_56, %c8_57] : memref<2x10xf32, #tpu.memory_space<smem>>
    %c8_58 = arith.constant 8 : index
    %138 = memref.load %arg3[%c8_58] : memref<10xf32, #tpu.memory_space<smem>>
    %c8_59 = arith.constant 8 : index
    %139 = memref.load %arg4[%c8_59] : memref<10xf32, #tpu.memory_space<smem>>
    %140 = vector.broadcast %136 : f32 to vector<8x128xf32>
    %141 = arith.mulf %1, %140 : vector<8x128xf32>
    %142 = vector.broadcast %137 : f32 to vector<8x128xf32>
    %143 = arith.mulf %3, %142 : vector<8x128xf32>
    %144 = arith.addf %141, %143 : vector<8x128xf32>
    %145 = vector.broadcast %138 : f32 to vector<8x128xf32>
    %146 = arith.addf %144, %145 : vector<8x128xf32>
    %cst_60 = arith.constant 0.000000e+00 : f32
    %147 = vector.broadcast %cst_60 : f32 to vector<8x128xf32>
    %148 = arith.maximumf %146, %147 : vector<8x128xf32>
    %149 = vector.broadcast %139 : f32 to vector<8x128xf32>
    %150 = arith.mulf %148, %149 : vector<8x128xf32>
    %151 = arith.addf %135, %150 : vector<8x128xf32>
    %c0_61 = arith.constant 0 : index
    %c9 = arith.constant 9 : index
    %152 = memref.load %arg2[%c0_61, %c9] : memref<2x10xf32, #tpu.memory_space<smem>>
    %c1_62 = arith.constant 1 : index
    %c9_63 = arith.constant 9 : index
    %153 = memref.load %arg2[%c1_62, %c9_63] : memref<2x10xf32, #tpu.memory_space<smem>>
    %c9_64 = arith.constant 9 : index
    %154 = memref.load %arg3[%c9_64] : memref<10xf32, #tpu.memory_space<smem>>
    %c9_65 = arith.constant 9 : index
    %155 = memref.load %arg4[%c9_65] : memref<10xf32, #tpu.memory_space<smem>>
    %156 = vector.broadcast %152 : f32 to vector<8x128xf32>
    %157 = arith.mulf %1, %156 : vector<8x128xf32>
    %158 = vector.broadcast %153 : f32 to vector<8x128xf32>
    %159 = arith.mulf %3, %158 : vector<8x128xf32>
    %160 = arith.addf %157, %159 : vector<8x128xf32>
    %161 = vector.broadcast %154 : f32 to vector<8x128xf32>
    %162 = arith.addf %160, %161 : vector<8x128xf32>
    %cst_66 = arith.constant 0.000000e+00 : f32
    %163 = vector.broadcast %cst_66 : f32 to vector<8x128xf32>
    %164 = arith.maximumf %162, %163 : vector<8x128xf32>
    %165 = vector.broadcast %155 : f32 to vector<8x128xf32>
    %166 = arith.mulf %164, %165 : vector<8x128xf32>
    %167 = arith.addf %151, %166 : vector<8x128xf32>
    %c0_67 = arith.constant 0 : index
    %c0_68 = arith.constant 0 : index
    %168 = vector.load %arg6[%c0_67, %c0_68] : memref<8x128xf32, #tpu.memory_space<vmem>>, vector<8x128xf32>
    tpu.vector_store %arg6[%c0_67, %c0_68], %167 {strides = array<i32>} : memref<8x128xf32, #tpu.memory_space<vmem>>, vector<8x128xf32>,
    return
  }
  func.func @transform_0(%arg0: i32) -> (i32, i32, i32) {
    %c0_i32 = arith.constant 0 : i32
    %c0_i32_0 = arith.constant 0 : i32
    %c0_i32_1 = arith.constant 0 : i32
    return %c0_i32, %arg0, %c0_i32_0 : i32, i32, i32
  }
  func.func @transform_1(%arg0: i32) -> (i32, i32) {
    %c0_i32 = arith.constant 0 : i32
    %c0_i32_0 = arith.constant 0 : i32
    %c0_i32_1 = arith.constant 0 : i32
    return %c0_i32, %c0_i32_0 : i32, i32
  }
  func.func @transform_2(%arg0: i32) -> i32 {
    %c0_i32 = arith.constant 0 : i32
    %c0_i32_0 = arith.constant 0 : i32
    return %c0_i32 : i32
  }
  func.func @transform_3(%arg0: i32) -> i32 {
    %c0_i32 = arith.constant 0 : i32
    %c0_i32_0 = arith.constant 0 : i32
    return %c0_i32 : i32
  }
  func.func @transform_4(%arg0: i32) -> i32 {
    %c0_i32 = arith.constant 0 : i32
    %c0_i32_0 = arith.constant 0 : i32
    return %c0_i32 : i32
  }
  func.func @transform_5(%arg0: i32) -> (i32, i32) {
    %c0_i32 = arith.constant 0 : i32
    %c0_i32_0 = arith.constant 0 : i32
    return %arg0, %c0_i32 : i32, i32
  }
}

</mosaic_0001>

<llo_original>
// kernel: dnn_forward.1
$region0: #{dnn_forward.1}
  #allocation0 [shape = 'u32[]', space=smem, size = 0x4, offset = 0x4, fixed_abs, tag = 'smem constant byte address 0x4 - core index']
  #allocation1 [shape = 'u32[72,128]{1,0:T(1,128)}', space=vmem, size = 0x9000, scoped, tag = 'internal scratch']
  #allocation2 [shape = 'f32[1]{0:T(128)S(6)}', space=smem, size = 0x200, scoped, tag = 'scoped memory for dnn_forward.1']
  %s0 = inlined_call_operand.vmem [shape: f32[2,8,128], index: 0, kind: input, shape index: {}]
  %s1 = inlined_call_operand.vmem [shape: f32[2,10], index: 1, kind: input, shape index: {}]
  %s2 = inlined_call_operand.vmem [shape: f32[10], index: 2, kind: input, shape index: {}]
  %s3 = inlined_call_operand.vmem [shape: f32[10], index: 3, kind: input, shape index: {}]
  %s4 = inlined_call_operand.<no memory space> [shape: f32[1], index: 4, kind: input, shape index: {}]
  %s5 = inlined_call_operand.vmem [shape: f32[8,128], index: 5, kind: output, shape index: {}]
  %s6 = sld [smem:[#allocation0]]
  $region42: #{dnn_forward.1} parent=0
    _
  %s8 = ssub.s32 1, %s6
  %s9 = scalar_select 0, %s8, %s6
  %10 = sst [smem:[#allocation2]] %s4
  $region1: #{dnn_forward.1} parent=0
    #allocation3 [shape = 'u8[1024]{0}', space=smem, size = 0x400, scoped, tag = 'input window, operand 1, single buffered']
    #allocation4 [shape = 's32[1]{0}', space=sflag, size = 0x4, scoped, tag = 'scoped memory for dnn_forward.1']
    #allocation5 [shape = 'u8[512]{0}', space=smem, size = 0x200, scoped, tag = 'input window, operand 2, single buffered']
    #allocation6 [shape = 's32[1]{0}', space=sflag, size = 0x4, scoped, tag = 'scoped memory for dnn_forward.1']
    #allocation7 [shape = 'u8[512]{0}', space=smem, size = 0x200, scoped, tag = 'input window, operand 3, single buffered']
    %11 = vsyncpa [#allocation4], 0
    %12 = vsyncpa [#allocation6], 0
    // Predicated region
    $region2: #{dnn_forward.1} parent=1 // pred_check
      _
    $region3: #{dnn_forward.1} parent=1 // pred_check_branch
      %14 = sbr.rel (0) target = $region5
    $region4: #{dnn_forward.1} parent=1 // pred_region
      _
    $region5: #{dnn_forward.1} parent=1 // pred_fallthru
      _
    // Predicated region
    $region6: #{dnn_forward.1} parent=1 // pred_check
      _
    $region7: #{dnn_forward.1} parent=1 // pred_check_branch
      %16 = sbr.rel (0) target = $region9
    $region8: #{dnn_forward.1} parent=1 // pred_region
      %18 = vsyncadd [#allocation4], 0
      %s20 = sshll.u32 %s1, 4
      %s21 = int_to_ptr.vmem [resolvable:$true] %s20
      %23 = dma.vmem_to_smem %s21, 32, [#allocation3], [#allocation4]
    $region9: #{dnn_forward.1} parent=1 // pred_fallthru
      _
    // Predicated region
    $region10: #{dnn_forward.1} parent=1 // pred_check
      _
    $region11: #{dnn_forward.1} parent=1 // pred_check_branch
      %25 = sbr.rel (0) target = $region13
    $region12: #{dnn_forward.1} parent=1 // pred_region
      %27 = vsyncadd [#allocation6], 0
      %s29 = sshll.u32 %s2, 4
      %s30 = int_to_ptr.vmem [resolvable:$true] %s29
      %32 = dma.vmem_to_smem %s30, 16, [#allocation5], [#allocation6]
    $region13: #{dnn_forward.1} parent=1 // pred_fallthru
      _
    // Predicated region
    $region14: #{dnn_forward.1} parent=1 // pred_check
      _
    $region15: #{dnn_forward.1} parent=1 // pred_check_branch
      %34 = sbr.rel (0) target = $region17
    $region16: #{dnn_forward.1} parent=1 // pred_region
      %36 = vsyncadd [#allocation6], 0
      %s38 = sshll.u32 %s3, 4
      %s39 = int_to_ptr.vmem [resolvable:$true] %s38
      %41 = dma.vmem_to_smem %s39, 16, [#allocation7], [#allocation6]
    $region17: #{dnn_forward.1} parent=1 // pred_fallthru
      _
    // Predicated region
    $region18: #{dnn_forward.1} parent=1 // pred_check
      _
    $region19: #{dnn_forward.1} parent=1 // pred_check_branch
      %43 = sbr.rel (0) target = $region21
    $region20: #{dnn_forward.1} parent=1 // pred_region
      _
    $region21: #{dnn_forward.1} parent=1 // pred_fallthru
      _
    // Predicated region
    $region22: #{dnn_forward.1} parent=1 // pred_check
      _
    $region23: #{dnn_forward.1} parent=1 // pred_check_branch
      %45 = sbr.rel (0) target = $region25
    $region24: #{dnn_forward.1} parent=1 // pred_region
      %47 = dma.done [#allocation4], 32
    $region25: #{dnn_forward.1} parent=1 // pred_fallthru
      _
    // Predicated region
    $region26: #{dnn_forward.1} parent=1 // pred_check
      _
    $region27: #{dnn_forward.1} parent=1 // pred_check_branch
      %49 = sbr.rel (0) target = $region29
    $region28: #{dnn_forward.1} parent=1 // pred_region
      %51 = dma.done [#allocation6], 16
    $region29: #{dnn_forward.1} parent=1 // pred_fallthru
      _
    // Predicated region
    $region30: #{dnn_forward.1} parent=1 // pred_check
      _
    $region31: #{dnn_forward.1} parent=1 // pred_check_branch
      %53 = sbr.rel (0) target = $region33
    $region32: #{dnn_forward.1} parent=1 // pred_region
      %55 = dma.done [#allocation6], 16
    $region33: #{dnn_forward.1} parent=1 // pred_fallthru
      _
    %56 = sfence
    %v57 = vld [vmem:[%s0] sm:$0xff]
    %s58 = scalar_lea.vmem %s0, 8
    %v59 = vld [vmem:[%s58] sm:$0xff]
    %s60 = sld [smem:[#allocation2]]
    %v61 = vstv %s60
    %v62 = vadd.f32 %v61, 0.0
    %s63 = sld [smem:[#allocation3]]
    %s64 = sld [smem:[#allocation3 + $0x80]]
    %s65 = sld [smem:[#allocation5]]
    %s66 = sld [smem:[#allocation7]]
    %v67 = vstv %s63
    %v68 = vmul.f32 %v57, %v67
    %v69 = vstv %s64
    %v70 = vmul.f32 %v59, %v69
    %v71 = vadd.f32 %v68, %v70
    %v72 = vstv %s65
    %v73 = vadd.f32 %v71, %v72
    %v74 = vmax.f32 %v73, 0.0
    %v75 = vstv %s66
    %v76 = vmul.f32 %v74, %v75
    %v77 = vadd.f32 %v62, %v76
    %s78 = sld [smem:[#allocation3 + $0x1]]
    %s79 = sld [smem:[#allocation3 + $0x81]]
    %s80 = sld [smem:[#allocation5 + $0x1]]
    %s81 = sld [smem:[#allocation7 + $0x1]]
    %v82 = vstv %s78
    %v83 = vmul.f32 %v57, %v82
    %v84 = vstv %s79
    %v85 = vmul.f32 %v59, %v84
    %v86 = vadd.f32 %v83, %v85
    %v87 = vstv %s80
    %v88 = vadd.f32 %v86, %v87
    %v89 = vmax.f32 %v88, 0.0
    %v90 = vstv %s81
    %v91 = vmul.f32 %v89, %v90
    %v92 = vadd.f32 %v77, %v91
    %s93 = sld [smem:[#allocation3 + $0x2]]
    %s94 = sld [smem:[#allocation3 + $0x82]]
    %s95 = sld [smem:[#allocation5 + $0x2]]
    %s96 = sld [smem:[#allocation7 + $0x2]]
    %v97 = vstv %s93
    %v98 = vmul.f32 %v57, %v97
    %v99 = vstv %s94
    %v100 = vmul.f32 %v59, %v99
    %v101 = vadd.f32 %v98, %v100
    %v102 = vstv %s95
    %v103 = vadd.f32 %v101, %v102
    %v104 = vmax.f32 %v103, 0.0
    %v105 = vstv %s96
    %v106 = vmul.f32 %v104, %v105
    %v107 = vadd.f32 %v92, %v106
    %s108 = sld [smem:[#allocation3 + $0x3]]
    %s109 = sld [smem:[#allocation3 + $0x83]]
    %s110 = sld [smem:[#allocation5 + $0x3]]
    %s111 = sld [smem:[#allocation7 + $0x3]]
    %v112 = vstv %s108
    %v113 = vmul.f32 %v57, %v112
    %v114 = vstv %s109
    %v115 = vmul.f32 %v59, %v114
    %v116 = vadd.f32 %v113, %v115
    %v117 = vstv %s110
    %v118 = vadd.f32 %v116, %v117
    %v119 = vmax.f32 %v118, 0.0
    %v120 = vstv %s111
    %v121 = vmul.f32 %v119, %v120
    %v122 = vadd.f32 %v107, %v121
    %s123 = sld [smem:[#allocation3 + $0x4]]
    %s124 = sld [smem:[#allocation3 + $0x84]]
    %s125 = sld [smem:[#allocation5 + $0x4]]
    %s126 = sld [smem:[#allocation7 + $0x4]]
    %v127 = vstv %s123
    %v128 = vmul.f32 %v57, %v127
    %v129 = vstv %s124
    %v130 = vmul.f32 %v59, %v129
    %v131 = vadd.f32 %v128, %v130
    %v132 = vstv %s125
    %v133 = vadd.f32 %v131, %v132
    %v134 = vmax.f32 %v133, 0.0
    %v135 = vstv %s126
    %v136 = vmul.f32 %v134, %v135
    %v137 = vadd.f32 %v122, %v136
    %s138 = sld [smem:[#allocation3 + $0x5]]
    %s139 = sld [smem:[#allocation3 + $0x85]]
    %s140 = sld [smem:[#allocation5 + $0x5]]
    %s141 = sld [smem:[#allocation7 + $0x5]]
    %v142 = vstv %s138
    %v143 = vmul.f32 %v57, %v142
    %v144 = vstv %s139
    %v145 = vmul.f32 %v59, %v144
    %v146 = vadd.f32 %v143, %v145
    %v147 = vstv %s140
    %v148 = vadd.f32 %v146, %v147
    %v149 = vmax.f32 %v148, 0.0
    %v150 = vstv %s141
    %v151 = vmul.f32 %v149, %v150
    %v152 = vadd.f32 %v137, %v151
    %s153 = sld [smem:[#allocation3 + $0x6]]
    %s154 = sld [smem:[#allocation3 + $0x86]]
    %s155 = sld [smem:[#allocation5 + $0x6]]
    %s156 = sld [smem:[#allocation7 + $0x6]]
    %v157 = vstv %s153
    %v158 = vmul.f32 %v57, %v157
    %v159 = vstv %s154
    %v160 = vmul.f32 %v59, %v159
    %v161 = vadd.f32 %v158, %v160
    %v162 = vstv %s155
    %v163 = vadd.f32 %v161, %v162
    %v164 = vmax.f32 %v163, 0.0
    %v165 = vstv %s156
    %v166 = vmul.f32 %v164, %v165
    %v167 = vadd.f32 %v152, %v166
    %s168 = sld [smem:[#allocation3 + $0x7]]
    %s169 = sld [smem:[#allocation3 + $0x87]]
    %s170 = sld [smem:[#allocation5 + $0x7]]
    %s171 = sld [smem:[#allocation7 + $0x7]]
    %v172 = vstv %s168
    %v173 = vmul.f32 %v57, %v172
    %v174 = vstv %s169
    %v175 = vmul.f32 %v59, %v174
    %v176 = vadd.f32 %v173, %v175
    %v177 = vstv %s170
    %v178 = vadd.f32 %v176, %v177
    %v179 = vmax.f32 %v178, 0.0
    %v180 = vstv %s171
    %v181 = vmul.f32 %v179, %v180
    %v182 = vadd.f32 %v167, %v181
    %s183 = sld [smem:[#allocation3 + $0x8]]
    %s184 = sld [smem:[#allocation3 + $0x88]]
    %s185 = sld [smem:[#allocation5 + $0x8]]
    %s186 = sld [smem:[#allocation7 + $0x8]]
    %v187 = vstv %s183
    %v188 = vmul.f32 %v57, %v187
    %v189 = vstv %s184
    %v190 = vmul.f32 %v59, %v189
    %v191 = vadd.f32 %v188, %v190
    %v192 = vstv %s185
    %v193 = vadd.f32 %v191, %v192
    %v194 = vmax.f32 %v193, 0.0
    %v195 = vstv %s186
    %v196 = vmul.f32 %v194, %v195
    %v197 = vadd.f32 %v182, %v196
    %s198 = sld [smem:[#allocation3 + $0x9]]
    %s199 = sld [smem:[#allocation3 + $0x89]]
    %s200 = sld [smem:[#allocation5 + $0x9]]
    %s201 = sld [smem:[#allocation7 + $0x9]]
    %v202 = vstv %s198
    %v203 = vmul.f32 %v57, %v202
    %v204 = vstv %s199
    %v205 = vmul.f32 %v59, %v204
    %v206 = vadd.f32 %v203, %v205
    %v207 = vstv %s200
    %v208 = vadd.f32 %v206, %v207
    %v209 = vmax.f32 %v208, 0.0
    %v210 = vstv %s201
    %v211 = vmul.f32 %v209, %v210
    %v212 = vadd.f32 %v197, %v211
    %213 = vst [vmem:[%s5] sm:$0xff] %v212
    // Predicated region
    $region34: #{dnn_forward.1} parent=1 // pred_check
      _
    $region35: #{dnn_forward.1} parent=1 // pred_check_branch
      %215 = sbr.rel (0) target = $region37
    $region36: #{dnn_forward.1} parent=1 // pred_region
      _
    $region37: #{dnn_forward.1} parent=1 // pred_fallthru
      _
    // Predicated region
    $region38: #{dnn_forward.1} parent=1 // pred_check
      _
    $region39: #{dnn_forward.1} parent=1 // pred_check_branch
      %217 = sbr.rel (0) target = $region41
    $region40: #{dnn_forward.1} parent=1 // pred_region
      _
    $region41: #{dnn_forward.1} parent=1 // pred_fallthru
      _
    %218 = vsyncpa [#allocation4], 1
    %219 = vsyncpa [#allocation6], 1

</llo_original>
